<compile_context>
chip_gen: v6e
topology: v6e:2x2x1
jax: 0.10.0
libtpu: 0.0.40
codegen_flags: <defaults>
</compile_context>

<pallas_src>
import functools
import math

import jax
import jax.numpy as jnp
from jax.experimental import pallas as pl
from jax.experimental.pallas import tpu as pltpu


def _round_up(x, m):
    return (x + m - 1) // m * m


def _vmem_capacity_bytes():
    try:
        return int(pltpu.get_tpu_info().vmem_capacity_bytes)
    except Exception:
        return 64 * 1024 * 1024          # assume the smallest (v7x: 64 MiB / TC)


_VMEM_CAP = _vmem_capacity_bytes()
# Leave headroom for Pallas double-buffering of inputs and outputs.
_VMEM_LIMIT = min(int(_VMEM_CAP * 0.55), 96 * 1024 * 1024)
_CONV_IN_BLOCK_BUDGET = max(1 << 20, min(4 << 20, _VMEM_LIMIT // 8))


# ----------------------------------------------------------------------------
# Pallas kernel 1: fused 3x3 stride-1 conv.
#  - horizontal (dx) taps folded into channels on the host (3x, not 9x, im2col)
#  - vertical (dy) taps are three tile-aligned row-shifted matmuls in-kernel
#  - bias fused in the epilogue, spatial row-bands form a parallel grid axis
# ----------------------------------------------------------------------------
def _conv3x3_kernel(x_ref, w_ref, b_ref, o_ref, *, w_stride):
    # x_ref: (1, (th+2)*W, 3*Cin), w_ref: (3, 3*Cin, Coutp), b_ref: (1, Coutp)
    thw = o_ref.shape[1]
    acc = jnp.dot(x_ref[0, 0:thw, :], w_ref[0],
                  preferred_element_type=jnp.float32)
    acc += jnp.dot(x_ref[0, w_stride:w_stride + thw, :], w_ref[1],
                   preferred_element_type=jnp.float32)
    acc += jnp.dot(x_ref[0, 2 * w_stride:2 * w_stride + thw, :], w_ref[2],
                   preferred_element_type=jnp.float32)
    o_ref[0, :, :] = (acc + b_ref[...]).astype(o_ref.dtype)


def _pick_band_rows(H, W, cin3, itemsize):
    best = 1
    for th in range(1, H + 1):
        if H % th:
            continue
        if (th + 2) * W * cin3 * itemsize <= _CONV_IN_BLOCK_BUDGET:
            best = th
    return best


def conv3x3_s1(x, w, b):
    """'same' 3x3 conv, stride 1.  x: (B,H,W,Cin), w: (3,3,Cin,Cout), b: (Cout,)."""
    B, H, W, Cin = x.shape
    Cout = w.shape[-1]
    assert W % 8 == 0
    # bf16 keeps the in-kernel row shift (dy*W) 16-sublane aligned only when
    # W % 16 == 0 (bf16 packs two rows per sublane tile); otherwise stay f32.
    cdt = jnp.bfloat16 if W % 16 == 0 else jnp.float32
    coutp = _round_up(Cout, 128)          # lane-dense output stores
    wp = w.astype(cdt)
    bp = b.astype(jnp.float32)
    if coutp != Cout:
        wp = jnp.pad(wp, ((0, 0), (0, 0), (0, 0), (0, coutp - Cout)))
        bp = jnp.pad(bp, (0, coutp - Cout))

    xp = jnp.pad(x.astype(cdt), ((0, 0), (1, 1), (1, 1), (0, 0)))
    # TODO(synk): the dx fold below still writes a 3x-wide copy to HBM; folding
    # it in-kernel (sublane-shifted views) would cut input traffic ~3x on v6e
    # at full resolution.
    xcat = jnp.concatenate([xp[:, :, dx:dx + W, :] for dx in range(3)], axis=-1)
    cin3 = 3 * Cin

    th = _pick_band_rows(H, W, cin3, jnp.dtype(cdt).itemsize)
    nb = H // th
    if nb == 1:
        xb = xcat.reshape(B, (H + 2) * W, cin3)
    else:
        # overlapping row-bands with a 2-row halo (duplicates only 2/th rows)
        xb = jnp.concatenate(
            [xcat[:, t * th:t * th + th + 2][:, None] for t in range(nb)], axis=1)
        xb = xb.reshape(B * nb, (th + 2) * W, cin3)
    wf = wp.reshape(3, cin3, coutp)
    bf = bp.reshape(1, coutp)

    out = pl.pallas_call(
        functools.partial(_conv3x3_kernel, w_stride=W),
        out_shape=jax.ShapeDtypeStruct((B * nb, th * W, coutp), jnp.bfloat16),
        grid=(B * nb,),
        in_specs=[pl.BlockSpec((1, (th + 2) * W, cin3), lambda t: (t, 0, 0)),
                  pl.BlockSpec((3, cin3, coutp), lambda t: (0, 0, 0)),
                  pl.BlockSpec((1, coutp), lambda t: (0, 0))],
        out_specs=pl.BlockSpec((1, th * W, coutp), lambda t: (t, 0, 0)),
        compiler_params=pltpu.CompilerParams(
            dimension_semantics=("parallel",),
            vmem_limit_bytes=_VMEM_LIMIT),
    )(xb, wf, bf)
    out = out.reshape(B, H * W, coutp)
    if coutp != Cout:
        out = out[..., :Cout]
    return out.reshape(B, H, W, Cout)


# ----------------------------------------------------------------------------
# Pallas kernel 2: matmul with fused bias (1x1 convs, stride-2 im2col convs).
# K is kept as one full-extent block (no K padding / reduction grid axis).
# ----------------------------------------------------------------------------
def _matmul_bias_kernel(a_ref, b_ref, bias_ref, o_ref):
    acc = jnp.dot(a_ref[...], b_ref[...], preferred_element_type=jnp.float32)
    o_ref[...] = (acc + bias_ref[...]).astype(o_ref.dtype)


def _pick_tile_m(Mp, K, tn, out_bytes):
    budget = int(_VMEM_LIMIT * 0.6)
    for tm in (1024, 512, 256, 128):
        if Mp % tm:
            continue
        need = 2 * (tm * K + K * tn) * 2 + 2 * tm * tn * out_bytes
        if need <= budget:
            return tm
    return 128


def pallas_matmul_bias(a, w, bias, out_dtype=jnp.bfloat16):
    """(M,K) @ (K,N) + bias; bf16 operands, f32 accumulation."""
    M, K = a.shape
    K2, N = w.shape
    assert K == K2
    a = a.astype(jnp.bfloat16)
    w = w.astype(jnp.bfloat16)
    bias = bias.astype(jnp.float32).reshape(1, N)
    Mp, Np = _round_up(M, 128), _round_up(N, 128)
    if Mp != M:
        a = jnp.pad(a, ((0, Mp - M), (0, 0)))
    if Np != N:
        w = jnp.pad(w, ((0, 0), (0, Np - N)))
        bias = jnp.pad(bias, ((0, 0), (0, Np - N)))
    tn = 256 if Np % 256 == 0 else 128
    tm = _pick_tile_m(Mp, K, tn, jnp.dtype(out_dtype).itemsize)
    out = pl.pallas_call(
        _matmul_bias_kernel,
        out_shape=jax.ShapeDtypeStruct((Mp, Np), out_dtype),
        grid=(Mp // tm, Np // tn),
        in_specs=[pl.BlockSpec((tm, K), lambda i, j: (i, 0)),
                  pl.BlockSpec((K, tn), lambda i, j: (0, j)),
                  pl.BlockSpec((1, tn), lambda i, j: (0, j))],
        out_specs=pl.BlockSpec((tm, tn), lambda i, j: (i, j)),
        compiler_params=pltpu.CompilerParams(
            dimension_semantics=("parallel", "parallel"),
            vmem_limit_bytes=_VMEM_LIMIT),
    )(a, w, bias)
    if Mp != M or Np != N:
        out = out[:M, :N]
    return out


# ----------------------------------------------------------------------------
# Pallas kernel 3: GroupNorm(32) + optional swish.
#   Fused single pass (stats + apply, one HBM read / write) when the per-item
#   slab fits VMEM; tiled two-pass fallback for full-resolution layers.
# ----------------------------------------------------------------------------
def _gn_fused_kernel(x_ref, g_ref, b_ref, mcg_ref, mgc_ref, o_ref,
                     *, cnt, eps, swish):
    x = x_ref[0, :, :].astype(jnp.float32)                  # (HW, C)
    s = jnp.sum(x, axis=0, keepdims=True)                   # (1, C)
    q = jnp.sum(x * x, axis=0, keepdims=True)
    sg = jnp.dot(s, mcg_ref[...], preferred_element_type=jnp.float32)   # (1, G)
    qg = jnp.dot(q, mcg_ref[...], preferred_element_type=jnp.float32)
    inv_cnt = 1.0 / cnt
    mean_g = sg * inv_cnt
    var_g = jnp.maximum(qg * inv_cnt - mean_g * mean_g, 0.0)
    inv_g = jax.lax.rsqrt(var_g + eps)
    mean_c = jnp.dot(mean_g, mgc_ref[...], preferred_element_type=jnp.float32)
    inv_c = jnp.dot(inv_g, mgc_ref[...], preferred_element_type=jnp.float32)
    scale = g_ref[...] * inv_c                               # (1, C)
    shift = b_ref[...] - mean_c * scale
    y = x * scale + shift
    if swish:
        y = y * jax.nn.sigmoid(y)
    o_ref[0, :, :] = y.astype(o_ref.dtype)


def _gn_stats_kernel(x_ref, sum_ref, sq_ref):
    @pl.when(pl.program_id(1) == 0)
    def _():
        sum_ref[...] = jnp.zeros_like(sum_ref)
        sq_ref[...] = jnp.zeros_like(sq_ref)

    x = x_ref[...].astype(jnp.float32)                       # (1, hw_t, C)
    sum_ref[...] += jnp.sum(x, axis=1, keepdims=True)
    sq_ref[...] += jnp.sum(x * x, axis=1, keepdims=True)


def _gn_apply_kernel(x_ref, scale_ref, shift_ref, o_ref, *, swish):
    y = x_ref[...].astype(jnp.float32) * scale_ref[...] + shift_ref[...]
    if swish:
        y = y * jax.nn.sigmoid(y)
    o_ref[...] = y.astype(o_ref.dtype)


def groupnorm_swish(x, gamma, beta, num_groups=32, eps=1e-6, swish=True):
    """x: (B, H, W, C) NHWC.  GroupNorm over (H, W, C/num_groups) per sample."""
    B, H, W, C = x.shape
    assert C % num_groups == 0
    cg = C // num_groups
    HW = H * W
    xr = x.reshape(B, HW, C)
    cnt = float(HW * cg)

    if HW * C <= 2 * 1024 * 1024:
        # fused single pass
        grp = jnp.repeat(jnp.arange(num_groups, dtype=jnp.int32), cg)   # (C,)
        mcg = jax.nn.one_hot(grp, num_groups, dtype=jnp.float32)        # (C, G)
        mgc = mcg.T                                                     # (G, C)
        out = pl.pallas_call(
            functools.partial(_gn_fused_kernel, cnt=cnt, eps=eps, swish=swish),
            out_shape=jax.ShapeDtypeStruct((B, HW, C), jnp.bfloat16),
            grid=(B,),
            in_specs=[pl.BlockSpec((1, HW, C), lambda b: (b, 0, 0)),
                      pl.BlockSpec((1, C), lambda b: (0, 0)),
                      pl.BlockSpec((1, C), lambda b: (0, 0)),
                      pl.BlockSpec((C, num_groups), lambda b: (0, 0)),
                      pl.BlockSpec((num_groups, C), lambda b: (0, 0))],
            out_specs=pl.BlockSpec((1, HW, C), lambda b: (b, 0, 0)),
            compiler_params=pltpu.CompilerParams(
                dimension_semantics=("parallel",),
                vmem_limit_bytes=_VMEM_LIMIT),
        )(xr, gamma.reshape(1, C).astype(jnp.float32),
          beta.reshape(1, C).astype(jnp.float32), mcg, mgc)
        return out.reshape(B, H, W, C)

    # two-pass fallback (full-resolution layers of the real config)
    hw_t = max(math.gcd(HW, 4096), 8)
    n_hw = HW // hw_t
    s, q = pl.pallas_call(
        _gn_stats_kernel,
        out_shape=(jax.ShapeDtypeStruct((B, 1, C), jnp.float32),
                   jax.ShapeDtypeStruct((B, 1, C), jnp.float32)),
        grid=(B, n_hw),
        in_specs=[pl.BlockSpec((1, hw_t, C), lambda b, h: (b, h, 0))],
        out_specs=(pl.BlockSpec((1, 1, C), lambda b, h: (b, 0, 0)),
                   pl.BlockSpec((1, 1, C), lambda b, h: (b, 0, 0))),
        compiler_params=pltpu.CompilerParams(
            dimension_semantics=("parallel", "arbitrary"),
            vmem_limit_bytes=_VMEM_LIMIT),
    )(xr)
    sum_g = s.reshape(B, num_groups, cg).sum(-1)
    sq_g = q.reshape(B, num_groups, cg).sum(-1)
    mean_g = sum_g / cnt
    var_g = jnp.maximum(sq_g / cnt - mean_g * mean_g, 0.0)
    inv_g = jax.lax.rsqrt(var_g + eps)
    mean_c = jnp.repeat(mean_g, cg, axis=-1)                 # (B, C)
    inv_c = jnp.repeat(inv_g, cg, axis=-1)
    scale_c = (gamma[None, :] * inv_c).reshape(B, 1, C).astype(jnp.float32)
    shift_c = (beta[None, :] - mean_c * gamma[None, :] * inv_c
               ).reshape(B, 1, C).astype(jnp.float32)
    out = pl.pallas_call(
        functools.partial(_gn_apply_kernel, swish=swish),
        out_shape=jax.ShapeDtypeStruct((B, HW, C), jnp.bfloat16),
        grid=(B, n_hw),
        in_specs=[pl.BlockSpec((1, hw_t, C), lambda b, h: (b, h, 0)),
                  pl.BlockSpec((1, 1, C), lambda b, h: (b, 0, 0)),
                  pl.BlockSpec((1, 1, C), lambda b, h: (b, 0, 0))],
        out_specs=pl.BlockSpec((1, hw_t, C), lambda b, h: (b, h, 0)),
        compiler_params=pltpu.CompilerParams(
            dimension_semantics=("parallel", "parallel"),
            vmem_limit_bytes=_VMEM_LIMIT),
    )(xr, scale_c, shift_c)
    return out.reshape(B, H, W, C)


# ----------------------------------------------------------------------------
# Pallas kernel 4: vector quantization (tiled over rows, codebook resident).
# ----------------------------------------------------------------------------
def _vq_kernel(z_ref, e_ref, esq_ref, zq_ref, idx_ref):
    z = z_ref[...]                                       # (bn, D) bf16
    e = e_ref[...]                                       # (K, D) bf16
    k = e.shape[0]
    scores = jax.lax.dot_general(z, e, (((1,), (1,)), ((), ())),
                                 preferred_element_type=jnp.float32)   # (bn, K)
    # ||z||^2 is constant per row -> dropped (argmin unchanged).
    d = esq_ref[...] - 2.0 * scores
    d_min = jnp.min(d, axis=-1, keepdims=True)
    iota = jax.lax.broadcasted_iota(jnp.int32, d.shape, 1)
    idx = jnp.min(jnp.where(d <= d_min, iota, k), axis=-1, keepdims=True)
    idx_ref[...] = idx
    onehot = (iota == idx).astype(jnp.bfloat16)          # (bn, K)
    zq_ref[...] = jnp.dot(onehot, e, preferred_element_type=jnp.float32)


def vq_lookup(z_flat, codebook):
    n, d = z_flat.shape
    k = codebook.shape[0]
    bn = 256
    np_ = _round_up(n, bn)
    z = z_flat.astype(jnp.bfloat16)
    if np_ != n:
        z = jnp.pad(z, ((0, np_ - n), (0, 0)))
    e32 = codebook.astype(jnp.float32)
    e_sq = jnp.sum(e32 * e32, axis=-1)[None, :]          # (1, K) f32
    e = codebook.astype(jnp.bfloat16)
    z_q, idx = pl.pallas_call(
        _vq_kernel,
        out_shape=(jax.ShapeDtypeStruct((np_, d), jnp.float32),
                   jax.ShapeDtypeStruct((np_, 1), jnp.int32)),
        grid=(np_ // bn,),
        in_specs=[pl.BlockSpec((bn, d), lambda i: (i, 0)),
                  pl.BlockSpec((k, d), lambda i: (0, 0)),
                  pl.BlockSpec((1, k), lambda i: (0, 0))],
        out_specs=(pl.BlockSpec((bn, d), lambda i: (i, 0)),
                   pl.BlockSpec((bn, 1), lambda i: (i, 0))),
        compiler_params=pltpu.CompilerParams(
            dimension_semantics=("parallel",),
            vmem_limit_bytes=_VMEM_LIMIT),
    )(z, e, e_sq)
    return z_q[:n], idx[:n, 0]


# ----------------------------------------------------------------------------
# Lane-dense elementwise / reduction helpers (no host casts, in-kernel f32).
# ----------------------------------------------------------------------------
_LANES = 1024
_ROW_GRAN = 32        # covers bf16/int8 sublane packing


def _lane_dense(x):
    """Flatten x into a (rows, 1024) slab; keeps x's dtype, pads with zeros."""
    flat = x.reshape(-1)
    n = flat.shape[0]
    n_pad = _round_up(n, _ROW_GRAN * _LANES)
    if n_pad != n:
        flat = jnp.pad(flat, (0, n_pad - n))
    return flat.reshape(n_pad // _LANES, _LANES), n


def _pick_row_tile(rows, cap=256):
    t = min(rows, cap)
    while rows % t:
        t -= _ROW_GRAN
    return t


def _affine_clamp_kernel(x_ref, o_ref, *, lo, hi, a, b):
    x = x_ref[...].astype(jnp.float32)
    if lo is not None:
        x = jnp.clip(x, lo, hi)
    o_ref[...] = (x * a + b).astype(o_ref.dtype)


def affine_clamp(x, lo=None, hi=None, a=1.0, b=0.0, out_dtype=jnp.float32):
    x2, n = _lane_dense(x)
    rows = x2.shape[0]
    tr = _pick_row_tile(rows)
    out = pl.pallas_call(
        functools.partial(_affine_clamp_kernel, lo=lo, hi=hi, a=a, b=b),
        out_shape=jax.ShapeDtypeStruct((rows, _LANES), out_dtype),
        grid=(rows // tr,),
        in_specs=[pl.BlockSpec((tr, _LANES), lambda i: (i, 0))],
        out_specs=pl.BlockSpec((tr, _LANES), lambda i: (i, 0)),
        compiler_params=pltpu.CompilerParams(
            dimension_semantics=("parallel",),
            vmem_limit_bytes=_VMEM_LIMIT),
    )(x2)
    return out.reshape(-1)[:n].reshape(x.shape)


def _diff_stats_kernel(a_ref, b_ref, abs_ref, sq_ref):
    @pl.when(pl.program_id(0) == 0)
    def _():
        abs_ref[...] = jnp.zeros_like(abs_ref)
        sq_ref[...] = jnp.zeros_like(sq_ref)

    d = a_ref[...].astype(jnp.float32) - b_ref[...].astype(jnp.float32)
    abs_ref[...] += jnp.sum(jnp.abs(d), axis=0, keepdims=True)
    sq_ref[...] += jnp.sum(d * d, axis=0, keepdims=True)


def diff_stats(a, b):
    """Returns (mean |a-b|, mean (a-b)^2).  Inputs may have different dtypes."""
    assert a.shape == b.shape
    a2, n = _lane_dense(a)
    b2, _ = _lane_dense(b)              # zero padding contributes 0 to both sums
    rows = a2.shape[0]
    tr = _pick_row_tile(rows)
    v_abs, v_sq = pl.pallas_call(
        _diff_stats_kernel,
        out_shape=(jax.ShapeDtypeStruct((1, _LANES), jnp.float32),
                   jax.ShapeDtypeStruct((1, _LANES), jnp.float32)),
        grid=(rows // tr,),
        in_specs=[pl.BlockSpec((tr, _LANES), lambda i: (i, 0)),
                  pl.BlockSpec((tr, _LANES), lambda i: (i, 0))],
        out_specs=(pl.BlockSpec((1, _LANES), lambda i: (0, 0)),
                   pl.BlockSpec((1, _LANES), lambda i: (0, 0))),
        compiler_params=pltpu.CompilerParams(
            dimension_semantics=("arbitrary",),
            vmem_limit_bytes=_VMEM_LIMIT),
    )(a2, b2)
    # tiny host-side finish (1 x 1024 f32 each)
    return jnp.sum(v_abs) / n, jnp.sum(v_sq) / n


# ----------------------------------------------------------------------------
# Conv / upsample glue.
# ----------------------------------------------------------------------------
def conv2d(x, w, b, stride=1):
    """x: NHWC, w: (kh, kw, Cin, Cout), b: (Cout,)."""
    B, H, W, Cin = x.shape
    kh, kw, _, Cout = w.shape
    if kh == 1 and kw == 1:
        y = pallas_matmul_bias(x.reshape(-1, Cin), w.reshape(Cin, Cout), b)
        return y.reshape(B, H, W, Cout)
    if stride == 1:
        return conv3x3_s1(x, w, b)
    # stride-2 downsample, taming-style asymmetric pad (0,1,0,1): im2col (bf16)
    # + fused-bias matmul.  Output is 4x smaller so the 9x patch blowup is mild.
    xp = jnp.pad(x.astype(jnp.bfloat16), ((0, 0), (0, 1), (0, 1), (0, 0)))
    Ho = (xp.shape[1] - kh) // stride + 1
    Wo = (xp.shape[2] - kw) // stride + 1
    cols = []
    for dy in range(kh):
        for dx in range(kw):
            cols.append(xp[:, dy:dy + stride * (Ho - 1) + 1:stride,
                           dx:dx + stride * (Wo - 1) + 1:stride, :])
    patches = jnp.concatenate(cols, axis=-1)             # (B, Ho, Wo, 9*Cin)
    y = pallas_matmul_bias(patches.reshape(-1, kh * kw * Cin),
                           w.reshape(kh * kw * Cin, Cout), b)
    return y.reshape(B, Ho, Wo, Cout)


def upsample_nearest_2x(x):
    # TODO(synk): could be fused into the following conv3x3's input path
    # (read src pixel i//2) to avoid writing the 4x-larger tensor to HBM.
    B, H, W, C = x.shape
    y = jnp.broadcast_to(x[:, :, None, :, None, :], (B, H, 2, W, 2, C))
    return y.reshape(B, 2 * H, 2 * W, C)


# ----------------------------------------------------------------------------
# Parameter construction (deterministic, in-script).
# ----------------------------------------------------------------------------
class _KeyGen:
    def __init__(self, key):
        self._key = key
        self._i = 0

    def __call__(self):
        self._i += 1
        return jax.random.fold_in(self._key, self._i)


def _conv_init(kg, kh, kw, cin, cout):
    scale = 1.0 / math.sqrt(kh * kw * cin)
    w = jax.random.normal(kg(), (kh, kw, cin, cout), jnp.float32) * scale
    b = jnp.zeros((cout,), jnp.float32)
    return {'w': w, 'b': b}


def _gn_init(c):
    return {'g': jnp.ones((c,), jnp.float32), 'b': jnp.zeros((c,), jnp.float32)}


def _resblock_init(kg, cin, cout):
    p = {'norm1': _gn_init(cin),
         'conv1': _conv_init(kg, 3, 3, cin, cout),
         'norm2': _gn_init(cout),
         'conv2': _conv_init(kg, 3, 3, cout, cout)}
    if cin != cout:
        p['nin'] = _conv_init(kg, 1, 1, cin, cout)
    return p


def build_encoder_params(kg, cfg):
    hc = cfg['hidden_channels']
    p = {'conv_in': _conv_init(kg, 3, 3, cfg['num_channels'], hc), 'down': []}
    block_in = hc
    for i in range(cfg['num_resolutions']):
        block_out = hc * cfg['channel_mult'][i]
        lvl = {'blocks': []}
        for _ in range(cfg['num_res_blocks']):
            lvl['blocks'].append(_resblock_init(kg, block_in, block_out))
            block_in = block_out
        if i < cfg['num_resolutions'] - 1:
            lvl['downsample'] = _conv_init(kg, 3, 3, block_in, block_in)
        p['down'].append(lvl)
    p['mid'] = [_resblock_init(kg, block_in, block_in),
                _resblock_init(kg, block_in, block_in)]
    p['norm_out'] = _gn_init(block_in)
    p['conv_out'] = _conv_init(kg, 3, 3, block_in, cfg['z_channels'])
    return p


def build_decoder_params(kg, cfg):
    hc = cfg['hidden_channels']
    block_in = hc * cfg['channel_mult'][-1]
    p = {'conv_in': _conv_init(kg, 3, 3, cfg['z_channels'], block_in)}
    p['mid'] = [_resblock_init(kg, block_in, block_in),
                _resblock_init(kg, block_in, block_in)]
    p['up'] = []
    for i in reversed(range(cfg['num_resolutions'])):
        block_out = hc * cfg['channel_mult'][i]
        lvl = {'blocks': []}
        for _ in range(cfg['num_res_blocks']):
            lvl['blocks'].append(_resblock_init(kg, block_in, block_out))
            block_in = block_out
        if i > 0:
            lvl['upsample'] = _conv_init(kg, 3, 3, block_in, block_in)
        p['up'].append(lvl)
    p['norm_out'] = _gn_init(block_in)
    p['conv_out'] = _conv_init(kg, 3, 3, block_in, cfg['num_channels'])
    return p


# ----------------------------------------------------------------------------
# Network forward passes (Pixel_Eecoder / Pixel_Decoder, VQGAN-style).
# ----------------------------------------------------------------------------
def resblock_forward(x, p):
    h = groupnorm_swish(x, p['norm1']['g'], p['norm1']['b'], swish=True)
    h = conv2d(h, p['conv1']['w'], p['conv1']['b'])
    h = groupnorm_swish(h, p['norm2']['g'], p['norm2']['b'], swish=True)
    h = conv2d(h, p['conv2']['w'], p['conv2']['b'])
    if 'nin' in p:
        x = conv2d(x, p['nin']['w'], p['nin']['b'])
    return (x.astype(jnp.float32) + h.astype(jnp.float32)).astype(jnp.bfloat16)


def encoder_forward(x, p, cfg):
    h = conv2d(x, p['conv_in']['w'], p['conv_in']['b'])
    for i in range(cfg['num_resolutions']):
        lvl = p['down'][i]
        for blk in lvl['blocks']:
            h = resblock_forward(h, blk)
        if 'downsample' in lvl:
            h = conv2d(h, lvl['downsample']['w'], lvl['downsample']['b'], stride=2)
    h = resblock_forward(h, p['mid'][0])
    h = resblock_forward(h, p['mid'][1])
    h = groupnorm_swish(h, p['norm_out']['g'], p['norm_out']['b'], swish=True)
    h = conv2d(h, p['conv_out']['w'], p['conv_out']['b'])
    return h                                             # (B, h, w, z_channels)


def decoder_forward(z, p, cfg):
    h = conv2d(z, p['conv_in']['w'], p['conv_in']['b'])
    h = resblock_forward(h, p['mid'][0])
    h = resblock_forward(h, p['mid'][1])
    for lvl in p['up']:
        for blk in lvl['blocks']:
            h = resblock_forward(h, blk)
        if 'upsample' in lvl:
            h = upsample_nearest_2x(h)
            h = conv2d(h, lvl['upsample']['w'], lvl['upsample']['b'])
    h = groupnorm_swish(h, p['norm_out']['g'], p['norm_out']['b'], swish=True)
    h = conv2d(h, p['conv_out']['w'], p['conv_out']['b'])
    return h                                             # (B, H, W, num_channels)


# ----------------------------------------------------------------------------
# PretrainedTokenizer-equivalent module.
# ----------------------------------------------------------------------------
def _to_nchw(x):
    return jnp.transpose(x, (0, 3, 1, 2))


def _to_nhwc(x):
    return jnp.transpose(x, (0, 2, 3, 1))


class PretrainedTokenizerPallas:
    def __init__(self, key, cfg):
        self.cfg = cfg
        kg = _KeyGen(key)
        # TODO(synk): original loads pretrained VQGAN weights from a .pt file;
        # here parameters are deterministic synthetic inits of the same structure.
        self.enc_params = build_encoder_params(kg, cfg)
        self.dec_params = build_decoder_params(kg, cfg)
        k = cfg['num_embeddings']
        self.codebook = jax.random.uniform(
            kg(), (k, cfg['embedding_dim']), jnp.float32, -1.0 / k, 1.0 / k)
        self.commitment_cost = cfg['commitment_cost']
        self.use_watermark_encoder = False
        # Original __init__ sets loss_name='' (forward would raise); we select
        # the single implemented branch so forward is exercisable.
        self.loss_name = 'hard-to-soft-with-ae'
        self.loss_weight = 0.0

    # --- quantizer (Pixel_Quantizer) -----------------------------------
    def quantize(self, h_nhwc):
        B, hh, ww, D = h_nhwc.shape
        z_flat = h_nhwc.reshape(-1, D)
        z_q_flat, idx = vq_lookup(z_flat, self.codebook)
        _, mse = diff_stats(z_q_flat, z_flat)
        loss = (1.0 + self.commitment_cost) * mse   # e-latent + commitment terms
        z_q = z_q_flat.reshape(B, hh, ww, D)        # straight-through is identity fwd
        indices = idx.reshape(B, hh, ww)
        return z_q, indices, loss

    def get_codebook_entry(self, codes):
        # codes: (B, L) int32 tokens
        B, L = codes.shape
        n = int(round(math.sqrt(L)))
        assert n * n == L
        z_q = jnp.take(self.codebook, codes.reshape(-1), axis=0)
        return z_q.reshape(B, n, n, self.cfg['embedding_dim'])

    # --- encode / decode helpers ----------------------------------------
    def encode_nhwc(self, x_nhwc):
        return encoder_forward(x_nhwc, self.enc_params, self.cfg)

    def decode_like_taming(self, z_q_nhwc, decoder_params):
        dec = decoder_forward(z_q_nhwc, decoder_params, self.cfg)
        return affine_clamp(dec, lo=0.0, hi=1.0, a=2.0, b=-1.0,
                            out_dtype=jnp.float32)        # clamp(0,1)*2-1

    def quantize_like_taming(self, h_nhwc):
        z_q, indices, loss = self.quantize(h_nhwc)
        return z_q, loss, (None, None, indices)

    def encode_like_taming(self, x_nhwc):
        x = affine_clamp(x_nhwc, a=0.5, b=0.5, out_dtype=jnp.bfloat16)  # (x+1)/2
        h = self.encode_nhwc(x)
        return self.quantize_like_taming(h)

    # --- forward (mirrors PretrainedTokenizer.forward) -------------------
    def forward(self, x, split=None, batch_idx=None,
                augmentations=None, augmentations_p=0.0):
        res = self.cfg['resolution']
        if x.ndim == 4 and x.shape[2] == x.shape[3] and x.shape[3] == res:
            # image branch (original checks resolution in [256, 512]; scaled)
            x_nhwc = _to_nhwc(x).astype(jnp.float32)
            z_q, qloss, (_, _, z_indices) = self.encode_like_taming(x_nhwc)
            z_indices = z_indices.reshape(x.shape[0], -1)
        else:
            # token-index branch
            z_indices = x
            z_q = self.get_codebook_entry(x)
            qloss = jnp.float32(0.0)
        assert z_q.shape[1] == z_q.shape[2]   # square latent (scaled-down check)

        xrec = self.decode_like_taming(z_q, self.dec_params)
        # TODO(synk): original uses a separate self.orig_decoder; no weights exist
        # for it in __init__, so the second decode would be bit-identical — alias
        # it instead of recomputing, and the rec-vs-rec loss is exactly zero.
        xrec_orig_decoder = xrec
        rec_mean_abs = jnp.float32(0.0)
        # TODO(synk): LPIPS perceptual loss needs a pretrained VGG; contributes 0 here.
        p_loss = jnp.float32(0.0)
        nll_loss = rec_mean_abs + p_loss
        vqgan_loss = nll_loss + qloss

        # augmentations=None path of the original forward
        xrec_maybe_augmented = xrec
        was_augmented = False

        zrec = self.encode_nhwc(
            affine_clamp(xrec_maybe_augmented, a=0.5, b=0.5, out_dtype=jnp.bfloat16))
        zrec_q, _, (_, _, zrec_indices) = self.quantize_like_taming(zrec)
        zrec_indices = zrec_indices.reshape(xrec_maybe_augmented.shape[0], -1)
        assert zrec.shape == z_q.shape

        if self.loss_name == 'hard-to-soft-with-ae':
            _, idem_loss = diff_stats(z_q, zrec)     # not-augmented branch
            loss = vqgan_loss + self.loss_weight * idem_loss
        else:
            raise ValueError(f'Loss {self.loss_name} not supported')

        # Device scalars (no blocking host transfers inside forward).
        log_dict = {
            'vqgan_loss': vqgan_loss,
            'vqgan_rec_loss': rec_mean_abs,
            'vqgan_rec_loss_perceptual_component': p_loss,
            'vqgan_codebook_loss': qloss,
            'idem_loss': idem_loss,
            'loss': loss,
            'loss_weight': self.loss_weight,
        }
        res_dict = {
            'orig_z_q': _to_nchw(z_q),
            'orig_z_indices': z_indices,
            'rec_x': _to_nchw(xrec),
            'rec_x_maybe_augmented': _to_nchw(xrec_maybe_augmented),
            'rec_x_orig_decoder': _to_nchw(xrec_orig_decoder),
            'rec_z': _to_nchw(zrec),
            'rec_z_q': _to_nchw(zrec_q),
            'rec_z_indices': zrec_indices,
        }
        return loss, res_dict, log_dict, was_augmented


# ----------------------------------------------------------------------------
if __name__ == "__main__":
    # Small config consistent with the module structure (scaled from
    # hidden=128, mult=[1,1,2,2,4], res=256, z=256, K=1024).
    CFG = dict(channel_mult=(1, 1, 2), num_resolutions=3, hidden_channels=32,
               num_channels=3, num_res_blocks=1, resolution=32, z_channels=64,
               num_embeddings=128, embedding_dim=64, commitment_cost=0.25)

    root = jax.random.PRNGKey(0)
    tok = PretrainedTokenizerPallas(jax.random.fold_in(root, 1), CFG)

    x = jax.random.uniform(jax.random.fold_in(root, 2),
                           (2, 3, CFG['resolution'], CFG['resolution']),
                           jnp.float32, -1.0, 1.0)      # NCHW, range [-1, 1]

    loss, res_dict, log_dict, was_augmented = tok.forward(
        x, split='train', batch_idx=0, augmentations=None, augmentations_p=0.0)

    jax.block_until_ready(loss)
    jax.block_until_ready(res_dict['rec_x'])
    jax.block_until_ready(res_dict['rec_z_indices'])

    assert res_dict['rec_x'].shape == x.shape
    assert res_dict['orig_z_q'].shape == (2, CFG['z_channels'], 8, 8)
    assert res_dict['orig_z_indices'].shape == (2, 64)
    print("KERNEL_OK")
</pallas_src>

<mosaic_0001>
module attributes {stable_mosaic.version = 11 : i64} {
  func.func @_affine_clamp_kernel(%arg0: i32, %arg1: memref<32x1024xf32, #tpu.memory_space<vmem>>, %arg2: memref<32x1024xbf16, #tpu.memory_space<vmem>>) attributes {dimension_semantics = [#tpu.dimension_semantics<parallel>], iteration_bounds = array<i64: 1>, scalar_prefetch = 0 : i64, scratch_operands = 0 : i64, tpu.core_type = #tpu.core_type<tc>, window_params = [{transform_indices = @transform_0, window_bounds = array<i64: 32, 1024>}, {transform_indices = @transform_1, window_bounds = array<i64: 32, 1024>}]} {
    %c0 = arith.constant 0 : index
    %c0_0 = arith.constant 0 : index
    %0 = vector.load %arg1[%c0, %c0_0] : memref<32x1024xf32, #tpu.memory_space<vmem>>, vector<32x1024xf32>
    %cst = arith.constant 5.000000e-01 : f32
    %1 = vector.broadcast %cst : f32 to vector<32x1024xf32>
    %2 = arith.mulf %0, %1 : vector<32x1024xf32>
    %cst_1 = arith.constant 5.000000e-01 : f32
    %3 = vector.broadcast %cst_1 : f32 to vector<32x1024xf32>
    %4 = arith.addf %2, %3 : vector<32x1024xf32>
    %5 = arith.truncf %4 : vector<32x1024xf32> to vector<32x1024xbf16>
    %c0_2 = arith.constant 0 : index
    %c0_3 = arith.constant 0 : index
    %6 = vector.load %arg2[%c0_2, %c0_3] : memref<32x1024xbf16, #tpu.memory_space<vmem>>, vector<32x1024xbf16>
    tpu.vector_store %arg2[%c0_2, %c0_3], %5 {strides = array<i32>} : memref<32x1024xbf16, #tpu.memory_space<vmem>>, vector<32x1024xbf16>,
    return
  }
  func.func @transform_0(%arg0: i32) -> (i32, i32) {
    %c0_i32 = arith.constant 0 : i32
    %c0_i32_0 = arith.constant 0 : i32
    return %arg0, %c0_i32 : i32, i32
  }
  func.func @transform_1(%arg0: i32) -> (i32, i32) {
    %c0_i32 = arith.constant 0 : i32
    %c0_i32_0 = arith.constant 0 : i32
    return %arg0, %c0_i32 : i32, i32
  }
}

</mosaic_0001>

<llo_original>
// kernel: tpu_custom_call.1
$region0: #{tpu_custom_call.1}
  #allocation0 [shape = 'u32[]', space=smem, size = 0x4, offset = 0x4, fixed_abs, tag = 'smem constant byte address 0x4 - core index']
  #allocation1 [shape = 'u32[144,128]{1,0:T(1,128)}', space=vmem, size = 0x12000, scoped, tag = 'internal scratch']
  %s0 = inlined_call_operand.hbm [shape: f32[32,1024], index: 0, kind: input, shape index: {}]
  %s1 = inlined_call_operand.hbm [shape: bf16[32,1024], index: 1, kind: output, shape index: {}]
  %s2 = sld [smem:[#allocation0]]
  $region18: #{tpu_custom_call.1} parent=0
    _
  %s4 = ssub.s32 1, %s2
  %s5 = scalar_select 0, %s4, %s2
  $region1: #{tpu_custom_call.1} parent=0
    #allocation2 [shape = 'u8[131072]{0}', space=vmem, size = 0x20000, scoped, tag = 'input window, operand 0, single buffered']
    #allocation3 [shape = 's32[1]{0}', space=sflag, size = 0x4, scoped, tag = 'scoped memory for tpu_custom_call.1']
    #allocation4 [shape = 's32[1]{0}', space=sflag, size = 0x4, scoped, tag = 'scoped memory for tpu_custom_call.1']
    #allocation5 [shape = 'u8[65536]{0}', space=vmem, size = 0x10000, scoped, tag = 'output window, operand 0, single buffered']
    %6 = vsyncpa [#allocation3], 0
    %7 = vsyncpa [#allocation4], 0
    // Predicated region
    $region2: #{tpu_custom_call.1} parent=1 // pred_check
      _
    $region3: #{tpu_custom_call.1} parent=1 // pred_check_branch
      %9 = sbr.rel (0) target = $region5
    $region4: #{tpu_custom_call.1} parent=1 // pred_region
      %s11 = ssub.s32 4096, 4096
      %12 = vsyncadd [#allocation3], %s11
      %s13 = sshll.u32 [#allocation2], 4
      %s14 = int_to_ptr.vmem [resolvable:$true] %s13
      %19 = dma.hbm_to_vmem [thread:$0]  %s0, 4096, %s14, [#allocation3], 1024, 1024, 64
    $region5: #{tpu_custom_call.1} parent=1 // pred_fallthru
      _
    // Predicated region
    $region6: #{tpu_custom_call.1} parent=1 // pred_check
      _
    $region7: #{tpu_custom_call.1} parent=1 // pred_check_branch
      %21 = sbr.rel (0) target = $region9
    $region8: #{tpu_custom_call.1} parent=1 // pred_region
      %22 = dma.done [#allocation3], 4096
    $region9: #{tpu_custom_call.1} parent=1 // pred_fallthru
      _
    %v23 = vld [vmem:[#allocation2] sm:$0xff]
    %v24 = vld [vmem:[#allocation2 + $0x8] sm:$0xff]
    %v25 = vld [vmem:[#allocation2 + $0x10] sm:$0xff]
    %v26 = vld [vmem:[#allocation2 + $0x18] sm:$0xff]
    %v27 = vld [vmem:[#allocation2 + $0x20] sm:$0xff]
    %v28 = vld [vmem:[#allocation2 + $0x28] sm:$0xff]
    %v29 = vld [vmem:[#allocation2 + $0x30] sm:$0xff]
    %v30 = vld [vmem:[#allocation2 + $0x38] sm:$0xff]
    %v31 = vld [vmem:[#allocation2 + $0x40] sm:$0xff]
    %v32 = vld [vmem:[#allocation2 + $0x48] sm:$0xff]
    %v33 = vld [vmem:[#allocation2 + $0x50] sm:$0xff]
    %v34 = vld [vmem:[#allocation2 + $0x58] sm:$0xff]
    %v35 = vld [vmem:[#allocation2 + $0x60] sm:$0xff]
    %v36 = vld [vmem:[#allocation2 + $0x68] sm:$0xff]
    %v37 = vld [vmem:[#allocation2 + $0x70] sm:$0xff]
    %v38 = vld [vmem:[#allocation2 + $0x78] sm:$0xff]
    %v39 = vld [vmem:[#allocation2 + $0x80] sm:$0xff]
    %v40 = vld [vmem:[#allocation2 + $0x88] sm:$0xff]
    %v41 = vld [vmem:[#allocation2 + $0x90] sm:$0xff]
    %v42 = vld [vmem:[#allocation2 + $0x98] sm:$0xff]
    %v43 = vld [vmem:[#allocation2 + $0xa0] sm:$0xff]
    %v44 = vld [vmem:[#allocation2 + $0xa8] sm:$0xff]
    %v45 = vld [vmem:[#allocation2 + $0xb0] sm:$0xff]
    %v46 = vld [vmem:[#allocation2 + $0xb8] sm:$0xff]
    %v47 = vld [vmem:[#allocation2 + $0xc0] sm:$0xff]
    %v48 = vld [vmem:[#allocation2 + $0xc8] sm:$0xff]
    %v49 = vld [vmem:[#allocation2 + $0xd0] sm:$0xff]
    %v50 = vld [vmem:[#allocation2 + $0xd8] sm:$0xff]
    %v51 = vld [vmem:[#allocation2 + $0xe0] sm:$0xff]
    %v52 = vld [vmem:[#allocation2 + $0xe8] sm:$0xff]
    %v53 = vld [vmem:[#allocation2 + $0xf0] sm:$0xff]
    %v54 = vld [vmem:[#allocation2 + $0xf8] sm:$0xff]
    %v55 = vmul.f32 %v23, 0.5
    %v56 = vmul.f32 %v24, 0.5
    %v57 = vmul.f32 %v25, 0.5
    %v58 = vmul.f32 %v26, 0.5
    %v59 = vmul.f32 %v27, 0.5
    %v60 = vmul.f32 %v28, 0.5
    %v61 = vmul.f32 %v29, 0.5
    %v62 = vmul.f32 %v30, 0.5
    %v63 = vmul.f32 %v31, 0.5
    %v64 = vmul.f32 %v32, 0.5
    %v65 = vmul.f32 %v33, 0.5
    %v66 = vmul.f32 %v34, 0.5
    %v67 = vmul.f32 %v35, 0.5
    %v68 = vmul.f32 %v36, 0.5
    %v69 = vmul.f32 %v37, 0.5
    %v70 = vmul.f32 %v38, 0.5
    %v71 = vmul.f32 %v39, 0.5
    %v72 = vmul.f32 %v40, 0.5
    %v73 = vmul.f32 %v41, 0.5
    %v74 = vmul.f32 %v42, 0.5
    %v75 = vmul.f32 %v43, 0.5
    %v76 = vmul.f32 %v44, 0.5
    %v77 = vmul.f32 %v45, 0.5
    %v78 = vmul.f32 %v46, 0.5
    %v79 = vmul.f32 %v47, 0.5
    %v80 = vmul.f32 %v48, 0.5
    %v81 = vmul.f32 %v49, 0.5
    %v82 = vmul.f32 %v50, 0.5
    %v83 = vmul.f32 %v51, 0.5
    %v84 = vmul.f32 %v52, 0.5
    %v85 = vmul.f32 %v53, 0.5
    %v86 = vmul.f32 %v54, 0.5
    %v87 = vadd.f32 %v55, 0.5
    %v88 = vadd.f32 %v56, 0.5
    %v89 = vadd.f32 %v57, 0.5
    %v90 = vadd.f32 %v58, 0.5
    %v91 = vadd.f32 %v59, 0.5
    %v92 = vadd.f32 %v60, 0.5
    %v93 = vadd.f32 %v61, 0.5
    %v94 = vadd.f32 %v62, 0.5
    %v95 = vadd.f32 %v63, 0.5
    %v96 = vadd.f32 %v64, 0.5
    %v97 = vadd.f32 %v65, 0.5
    %v98 = vadd.f32 %v66, 0.5
    %v99 = vadd.f32 %v67, 0.5
    %v100 = vadd.f32 %v68, 0.5
    %v101 = vadd.f32 %v69, 0.5
    %v102 = vadd.f32 %v70, 0.5
    %v103 = vadd.f32 %v71, 0.5
    %v104 = vadd.f32 %v72, 0.5
    %v105 = vadd.f32 %v73, 0.5
    %v106 = vadd.f32 %v74, 0.5
    %v107 = vadd.f32 %v75, 0.5
    %v108 = vadd.f32 %v76, 0.5
    %v109 = vadd.f32 %v77, 0.5
    %v110 = vadd.f32 %v78, 0.5
    %v111 = vadd.f32 %v79, 0.5
    %v112 = vadd.f32 %v80, 0.5
    %v113 = vadd.f32 %v81, 0.5
    %v114 = vadd.f32 %v82, 0.5
    %v115 = vadd.f32 %v83, 0.5
    %v116 = vadd.f32 %v84, 0.5
    %v117 = vadd.f32 %v85, 0.5
    %v118 = vadd.f32 %v86, 0.5
    %v119 = vpack.c.bf16 %v95, %v87
    %v120 = vpack.c.bf16 %v96, %v88
    %v121 = vpack.c.bf16 %v97, %v89
    %v122 = vpack.c.bf16 %v98, %v90
    %v123 = vpack.c.bf16 %v99, %v91
    %v124 = vpack.c.bf16 %v100, %v92
    %v125 = vpack.c.bf16 %v101, %v93
    %v126 = vpack.c.bf16 %v102, %v94
    %v127 = vpack.c.bf16 %v111, %v103
    %v128 = vpack.c.bf16 %v112, %v104
    %v129 = vpack.c.bf16 %v113, %v105
    %v130 = vpack.c.bf16 %v114, %v106
    %v131 = vpack.c.bf16 %v115, %v107
    %v132 = vpack.c.bf16 %v116, %v108
    %v133 = vpack.c.bf16 %v117, %v109
    %v134 = vpack.c.bf16 %v118, %v110
    %v151 = vunpack.c.l.b16 %v119
    %v152 = vunpack.c.l.b16 %v120
    %v153 = vunpack.c.l.b16 %v121
    %v154 = vunpack.c.l.b16 %v122
    %v155 = vunpack.c.l.b16 %v123
    %v156 = vunpack.c.l.b16 %v124
    %v157 = vunpack.c.l.b16 %v125
    %v158 = vunpack.c.l.b16 %v126
    %v159 = vunpack.c.h.b16 %v119
    %v160 = vunpack.c.h.b16 %v120
    %v161 = vunpack.c.h.b16 %v121
    %v162 = vunpack.c.h.b16 %v122
    %v163 = vunpack.c.h.b16 %v123
    %v164 = vunpack.c.h.b16 %v124
    %v165 = vunpack.c.h.b16 %v125
    %v166 = vunpack.c.h.b16 %v126
    %v167 = vunpack.c.l.b16 %v127
    %v168 = vunpack.c.l.b16 %v128
    %v169 = vunpack.c.l.b16 %v129
    %v170 = vunpack.c.l.b16 %v130
    %v171 = vunpack.c.l.b16 %v131
    %v172 = vunpack.c.l.b16 %v132
    %v173 = vunpack.c.l.b16 %v133
    %v174 = vunpack.c.l.b16 %v134
    %v175 = vunpack.c.h.b16 %v127
    %v176 = vunpack.c.h.b16 %v128
    %v177 = vunpack.c.h.b16 %v129
    %v178 = vunpack.c.h.b16 %v130
    %v179 = vunpack.c.h.b16 %v131
    %v180 = vunpack.c.h.b16 %v132
    %v181 = vunpack.c.h.b16 %v133
    %v182 = vunpack.c.h.b16 %v134
    %v183 = vpack.c.b16 %v152, %v151
    %v184 = vpack.c.b16 %v154, %v153
    %v185 = vpack.c.b16 %v156, %v155
    %v186 = vpack.c.b16 %v158, %v157
    %v187 = vpack.c.b16 %v160, %v159
    %v188 = vpack.c.b16 %v162, %v161
    %v189 = vpack.c.b16 %v164, %v163
    %v190 = vpack.c.b16 %v166, %v165
    %v191 = vpack.c.b16 %v168, %v167
    %v192 = vpack.c.b16 %v170, %v169
    %v193 = vpack.c.b16 %v172, %v171
    %v194 = vpack.c.b16 %v174, %v173
    %v195 = vpack.c.b16 %v176, %v175
    %v196 = vpack.c.b16 %v178, %v177
    %v197 = vpack.c.b16 %v180, %v179
    %v198 = vpack.c.b16 %v182, %v181
    %215 = vst [vmem:[#allocation5] sm:$0xff] %v183
    %216 = vst [vmem:[#allocation5 + $0x8] sm:$0xff] %v184
    %217 = vst [vmem:[#allocation5 + $0x10] sm:$0xff] %v185
    %218 = vst [vmem:[#allocation5 + $0x18] sm:$0xff] %v186
    %219 = vst [vmem:[#allocation5 + $0x20] sm:$0xff] %v187
    %220 = vst [vmem:[#allocation5 + $0x28] sm:$0xff] %v188
    %221 = vst [vmem:[#allocation5 + $0x30] sm:$0xff] %v189
    %222 = vst [vmem:[#allocation5 + $0x38] sm:$0xff] %v190
    %223 = vst [vmem:[#allocation5 + $0x40] sm:$0xff] %v191
    %224 = vst [vmem:[#allocation5 + $0x48] sm:$0xff] %v192
    %225 = vst [vmem:[#allocation5 + $0x50] sm:$0xff] %v193
    %226 = vst [vmem:[#allocation5 + $0x58] sm:$0xff] %v194
    %227 = vst [vmem:[#allocation5 + $0x60] sm:$0xff] %v195
    %228 = vst [vmem:[#allocation5 + $0x68] sm:$0xff] %v196
    %229 = vst [vmem:[#allocation5 + $0x70] sm:$0xff] %v197
    %230 = vst [vmem:[#allocation5 + $0x78] sm:$0xff] %v198
    // Predicated region
    $region10: #{tpu_custom_call.1} parent=1 // pred_check
      _
    $region11: #{tpu_custom_call.1} parent=1 // pred_check_branch
      %232 = sbr.rel (0) target = $region13
    $region12: #{tpu_custom_call.1} parent=1 // pred_region
      %s234 = ssub.s32 2048, 2048
      %235 = vsyncadd [#allocation4], %s234
      %s236 = sshll.u32 [#allocation5], 4
      %s237 = int_to_ptr.vmem [resolvable:$true] %s236
      %242 = dma.vmem_to_hbm [thread:$0]  %s237, 2048, %s1, [#allocation4], 512, 512, 32
    $region13: #{tpu_custom_call.1} parent=1 // pred_fallthru
      _
    // Predicated region
    $region14: #{tpu_custom_call.1} parent=1 // pred_check
      _
    $region15: #{tpu_custom_call.1} parent=1 // pred_check_branch
      %244 = sbr.rel (0) target = $region17
    $region16: #{tpu_custom_call.1} parent=1 // pred_region
      %245 = dma.done [#allocation4], 2048
    $region17: #{tpu_custom_call.1} parent=1 // pred_fallthru
      _
    %246 = vsyncpa [#allocation3], 1
    %247 = vsyncpa [#allocation4], 1

</llo_original>
